<compile_context>
chip_gen: v7x
topology: tpu7x:2x2x1
jax: 0.10.0
libtpu: 0.0.40
codegen_flags: <defaults>
</compile_context>

<pallas_src>
import jax
import jax.numpy as jnp
from jax.experimental import pallas as pl
from jax.experimental.pallas import tpu as pltpu

_SLAB_LANES = 128  # lane-dense output width


def _round_up(n, m):
    return ((n + m - 1) // m) * m


# ---------------------------------------------------------------------------
# Host-side parameter packing (done once, outside the kernel)
# ---------------------------------------------------------------------------
def pack_params(params):
    """Fuse mu|logvar heads and pack all weights / biases into two slabs.

    Returns (w_packed bf16 [rows, ncols], b_packed f32 [8, ncols], dims).
    Row offsets are padded to multiples of 16 so static bf16 sub-views never
    straddle a packed-sublane boundary.
    """
    w_heads = jnp.concatenate([params["w_mu"], params["w_lv"]], axis=1)
    b_heads = jnp.concatenate([params["b_mu"], params["b_lv"]], axis=1)

    w_list = [params["w_enc"], w_heads, params["w_d1"], params["w_d2"]]
    b_list = [params["b_enc"], b_heads, params["b_d1"], params["b_d2"]]

    ncols = max(w.shape[1] for w in w_list)
    offs, off = [], 0
    for w in w_list:
        offs.append(off)
        off += _round_up(w.shape[0], 16)
    total_rows = _round_up(off, 16)

    w_packed = jnp.zeros((total_rows, ncols), jnp.float32)
    for w, r in zip(w_list, offs):
        w_packed = w_packed.at[r:r + w.shape[0], :w.shape[1]].set(w)
    w_packed = w_packed.astype(jnp.bfloat16)      # native MXU input dtype

    b_packed = jnp.zeros((8, ncols), jnp.float32)
    for i, b in enumerate(b_list):
        b_packed = b_packed.at[i:i + 1, :b.shape[1]].set(b)

    dims = dict(
        input_size=params["w_enc"].shape[0],
        h1=params["w_enc"].shape[1],
        latent=params["w_mu"].shape[1],
        r_enc=offs[0], r_heads=offs[1], r_d1=offs[2], r_d2=offs[3],
    )
    return w_packed, b_packed, dims


# ---------------------------------------------------------------------------
# Kernel
# ---------------------------------------------------------------------------
def _make_vae_kernel(dims):
    input_size = dims["input_size"]
    h1 = dims["h1"]
    latent = dims["latent"]
    r_enc, r_heads = dims["r_enc"], dims["r_heads"]
    r_d1, r_d2 = dims["r_d1"], dims["r_d2"]
    pad_lanes = _SLAB_LANES - (input_size + latent + 1)

    def kernel(x_ref, eps_ref, w_ref, b_ref, slab_ref):
        def dense(act_f32, row, k, n, bias_row):
            # bf16 x bf16 -> f32 accumulation on the MXU; static Ref views free.
            w = w_ref[row:row + k, 0:n]                 # bf16 (k, n)
            b = b_ref[bias_row:bias_row + 1, 0:n]       # f32  (1, n)
            y = jnp.dot(act_f32.astype(jnp.bfloat16), w,
                        preferred_element_type=jnp.float32)
            return y + b

        x = x_ref[...]                                  # (tm, input_size) f32
        eps = eps_ref[...]                              # (tm, latent)     f32
        tm = x.shape[0]

        # ---- encoder: Linear -> Tanh ----
        h = jnp.tanh(dense(x, r_enc, input_size, h1, 0))

        # ---- fused mu|logvar heads: one Linear -> Tanh, static lane split ----
        heads = jnp.tanh(dense(h, r_heads, h1, 2 * latent, 1))
        mu = heads[:, :latent]
        logvar = heads[:, latent:]

        # ---- reparameterize: s = exp(0.5*lv) == sqrt(exp(lv)); clamp is dead
        #      (logvar = tanh(..) in [-1,1] so exp(lv) >= e^-1 >> 1e-10) ----
        s = jnp.exp(0.5 * logvar)
        z = mu + s * eps
        std = s * s                                     # == exp(logvar)

        # ---- decoder: Linear -> Tanh, Linear -> Tanh ----
        h2 = jnp.tanh(dense(z, r_d1, latent, h1, 2))
        out = jnp.tanh(dense(h2, r_d2, h1, input_size, 3))

        # ---- per-row KL sum (over latent) ----
        kl_row = jnp.sum(mu * mu + std - logvar - 1.0, axis=-1, keepdims=True)

        # ---- single lane-dense 128-wide output slab ----
        pieces = [out, z, kl_row]
        if pad_lanes:
            pieces.append(jnp.zeros((tm, pad_lanes), jnp.float32))
        slab_ref[...] = jnp.concatenate(pieces, axis=-1)

    return kernel


# ---------------------------------------------------------------------------
# Wrapper
# ---------------------------------------------------------------------------
def vae_forward(x, eps, w_packed, b_packed, dims, *, batch_tile=None):
    B, input_size = x.shape
    latent = eps.shape[1]
    assert input_size == dims["input_size"] and latent == dims["latent"]
    assert input_size + latent + 1 <= _SLAB_LANES, "merged slab needs <=128 lanes"

    if batch_tile is None:
        # Coarse tiles (kernel is step-overhead bound, not MXU bound).  Prefer
        # an even >=2-step grid so v7x maps the "parallel" axis onto both TCs;
        # on single-TC v5e/v6e 1-2 steps is already minimal overhead.
        tm = B
        for cand in (1024, 512, 256, 128, 64, 32, 16):
            if cand <= B // 2 and B % (2 * cand) == 0:
                tm = cand
                break
    else:
        tm = min(batch_tile, B)
    assert tm % 16 == 0 and B % tm == 0, \
        "batch must be a multiple of the 16-aligned tile"
    num_tiles = B // tm

    kernel = _make_vae_kernel(dims)

    in_specs = [
        pl.BlockSpec((tm, input_size), lambda i: (i, 0)),   # x   (batch tiled)
        pl.BlockSpec((tm, latent), lambda i: (i, 0)),       # eps (batch tiled)
        pl.BlockSpec(w_packed.shape, lambda i: (0, 0)),     # weight slab (VMEM resident)
        pl.BlockSpec(b_packed.shape, lambda i: (0, 0)),     # bias slab   (VMEM resident)
    ]
    out_specs = pl.BlockSpec((tm, _SLAB_LANES), lambda i: (i, 0))
    out_shape = jax.ShapeDtypeStruct((B, _SLAB_LANES), jnp.float32)

    slab = pl.pallas_call(
        kernel,
        grid=(num_tiles,),
        in_specs=in_specs,
        out_specs=out_specs,
        out_shape=out_shape,
        compiler_params=pltpu.CompilerParams(
            dimension_semantics=("parallel",)),   # shards batch tiles across v7x's 2 TCs
    )(x, eps, w_packed, b_packed)

    recon = slab[:, :input_size]
    z = slab[:, input_size:input_size + latent]
    kl = 0.5 * jnp.mean(slab[:, input_size + latent])
    return recon, z, kl


# ---------------------------------------------------------------------------
# Params init (PyTorch Linear default: uniform +/- 1/sqrt(fan_in))
# ---------------------------------------------------------------------------
def init_params(key, input_size, layers):
    h1, latent = layers

    def linear(key, fan_in, fan_out):
        kw, kb = jax.random.split(key)
        bound = 1.0 / jnp.sqrt(fan_in)
        w = jax.random.uniform(kw, (fan_in, fan_out), jnp.float32, -bound, bound)
        b = jax.random.uniform(kb, (1, fan_out), jnp.float32, -bound, bound)
        return w, b

    keys = jax.random.split(key, 5)
    w_enc, b_enc = linear(keys[0], input_size, h1)   # encoder Linear
    w_mu, b_mu = linear(keys[1], h1, latent)         # mu head
    w_lv, b_lv = linear(keys[2], h1, latent)         # logvar head
    w_d1, b_d1 = linear(keys[3], latent, h1)         # decoder Linear 1
    w_d2, b_d2 = linear(keys[4], h1, input_size)     # decoder Linear 2
    return dict(w_enc=w_enc, b_enc=b_enc, w_mu=w_mu, b_mu=b_mu,
                w_lv=w_lv, b_lv=b_lv, w_d1=w_d1, b_d1=b_d1,
                w_d2=w_d2, b_d2=b_d2)


# ---------------------------------------------------------------------------
# Pure-JAX reference mirroring the kernel's bf16-matmul / f32-elementwise path
# ---------------------------------------------------------------------------
def reference_forward(x, eps, p):
    bf = jnp.bfloat16

    def dense(a, w, b):
        return jnp.dot(a.astype(bf), w.astype(bf),
                       preferred_element_type=jnp.float32) + b

    h = jnp.tanh(dense(x, p["w_enc"], p["b_enc"]))
    mu = jnp.tanh(dense(h, p["w_mu"], p["b_mu"]))
    logvar = jnp.tanh(dense(h, p["w_lv"], p["b_lv"]))
    s = jnp.exp(0.5 * logvar)                 # == sqrt(exp(logvar)); clamp dead
    z = mu + s * eps
    h2 = jnp.tanh(dense(z, p["w_d1"], p["b_d1"]))
    out = jnp.tanh(dense(h2, p["w_d2"], p["b_d2"]))
    kl = 0.5 * jnp.mean(jnp.sum(mu ** 2 + jnp.exp(logvar) - logvar - 1.0, axis=-1))
    return out, z, kl


if __name__ == "__main__":
    key = jax.random.PRNGKey(0)
    k_x, k_eps, k_p = jax.random.split(key, 3)

    batch = 256            # batched so the grid + MXU actually do work
    input_size = 32
    layers = [32, 16]      # encoder hidden = 32, latent = 16
    latent = layers[-1]

    x = jax.random.normal(k_x, (batch, input_size), jnp.float32)
    # TODO(synk): torch.randn_like inside reparameterize has no fixed-seed
    # in-kernel equivalent; eps is supplied as an explicit input instead.
    eps = jax.random.normal(k_eps, (batch, latent), jnp.float32)
    params = init_params(k_p, input_size, layers)

    w_packed, b_packed, dims = pack_params(params)      # host-side, once

    out, z, kl = vae_forward(x, eps, w_packed, b_packed, dims)
    out, z, kl = jax.block_until_ready((out, z, kl))

    # sanity check against pure-JAX reference (same bf16 matmul path)
    ref_out, ref_z, ref_kl = reference_forward(x, eps, params)
    assert jnp.allclose(out, ref_out, atol=1e-3), "reconstruction mismatch"
    assert jnp.allclose(z, ref_z, atol=1e-3), "latent mismatch"
    assert jnp.allclose(kl, ref_kl, rtol=1e-3, atol=1e-3), "KL mismatch"

    print("KERNEL_OK")
</pallas_src>

<mosaic_0001>
module attributes {stable_mosaic.version = 11 : i64} {
  func.func @kernel(%arg0: i32, %arg1: memref<128x32xf32, #tpu.memory_space<vmem>>, %arg2: memref<128x16xf32, #tpu.memory_space<vmem>>, %arg3: memref<112x32xbf16, #tpu.memory_space<vmem>>, %arg4: memref<8x32xf32, #tpu.memory_space<vmem>>, %arg5: memref<128x128xf32, #tpu.memory_space<vmem>>) attributes {dimension_semantics = [#tpu.dimension_semantics<parallel>], iteration_bounds = array<i64: 2>, scalar_prefetch = 0 : i64, scratch_operands = 0 : i64, tpu.core_type = #tpu.core_type<tc>, window_params = [{transform_indices = @transform_0, window_bounds = array<i64: 128, 32>}, {transform_indices = @transform_1, window_bounds = array<i64: 128, 16>}, {pipeline_mode = #tpu.pipeline_mode<synchronous>, transform_indices = @transform_2, window_bounds = array<i64: 112, 32>}, {pipeline_mode = #tpu.pipeline_mode<synchronous>, transform_indices = @transform_3, window_bounds = array<i64: 8, 32>}, {transform_indices = @transform_4, window_bounds = array<i64: 128, 128>}]} {
    %c0 = arith.constant 0 : index
    %c0_0 = arith.constant 0 : index
    %0 = vector.load %arg1[%c0, %c0_0] : memref<128x32xf32, #tpu.memory_space<vmem>>, vector<128x32xf32>
    %c0_1 = arith.constant 0 : index
    %c0_2 = arith.constant 0 : index
    %1 = vector.load %arg2[%c0_1, %c0_2] : memref<128x16xf32, #tpu.memory_space<vmem>>, vector<128x16xf32>
    %c0_3 = arith.constant 0 : index
    %c0_4 = arith.constant 0 : index
    %2 = vector.load %arg3[%c0_3, %c0_4] : memref<112x32xbf16, #tpu.memory_space<vmem>>, vector<32x32xbf16>
    %c0_5 = arith.constant 0 : index
    %c0_6 = arith.constant 0 : index
    %3 = vector.load %arg4[%c0_5, %c0_6] : memref<8x32xf32, #tpu.memory_space<vmem>>, vector<1x32xf32>
    %4 = arith.truncf %0 : vector<128x32xf32> to vector<128x32xbf16>
    %cst = arith.constant dense<0.000000e+00> : vector<128x32xf32>
    %5 = tpu.matmul %4, %2, %cst {dimension_numbers = #tpu.dot_dimension_numbers<[1], [0], [0], [1], [0, 0, 1, 1], [], []>} : vector<128x32xbf16>, vector<32x32xbf16>, vector<128x32xf32> -> vector<128x32xf32>
    %6 = vector.broadcast %3 : vector<1x32xf32> to vector<128x32xf32>
    %7 = arith.addf %5, %6 : vector<128x32xf32>
    %8 = math.tanh %7 : vector<128x32xf32>
    %c32 = arith.constant 32 : index
    %c0_7 = arith.constant 0 : index
    %9 = vector.load %arg3[%c32, %c0_7] : memref<112x32xbf16, #tpu.memory_space<vmem>>, vector<32x32xbf16>
    %c1 = arith.constant 1 : index
    %c0_8 = arith.constant 0 : index
    %10 = vector.load %arg4[%c1, %c0_8] : memref<8x32xf32, #tpu.memory_space<vmem>>, vector<1x32xf32>
    %11 = arith.truncf %8 : vector<128x32xf32> to vector<128x32xbf16>
    %cst_9 = arith.constant dense<0.000000e+00> : vector<128x32xf32>
    %12 = tpu.matmul %11, %9, %cst_9 {dimension_numbers = #tpu.dot_dimension_numbers<[1], [0], [0], [1], [0, 0, 1, 1], [], []>} : vector<128x32xbf16>, vector<32x32xbf16>, vector<128x32xf32> -> vector<128x32xf32>
    %13 = vector.broadcast %10 : vector<1x32xf32> to vector<128x32xf32>
    %14 = arith.addf %12, %13 : vector<128x32xf32>
    %15 = math.tanh %14 : vector<128x32xf32>
    %16 = vector.extract_strided_slice %15 {offsets = [0, 0], sizes = [128, 16], strides = [1, 1]} : vector<128x32xf32> to vector<128x16xf32>
    %17 = vector.extract_strided_slice %15 {offsets = [0, 16], sizes = [128, 16], strides = [1, 1]} : vector<128x32xf32> to vector<128x16xf32>
    %cst_10 = arith.constant 5.000000e-01 : f32
    %18 = vector.broadcast %cst_10 : f32 to vector<128x16xf32>
    %19 = arith.mulf %18, %17 : vector<128x16xf32>
    %20 = math.exp %19 : vector<128x16xf32>
    %21 = arith.mulf %20, %1 : vector<128x16xf32>
    %22 = arith.addf %16, %21 : vector<128x16xf32>
    %23 = arith.mulf %20, %20 : vector<128x16xf32>
    %c64 = arith.constant 64 : index
    %c0_11 = arith.constant 0 : index
    %24 = vector.load %arg3[%c64, %c0_11] : memref<112x32xbf16, #tpu.memory_space<vmem>>, vector<16x32xbf16>
    %c2 = arith.constant 2 : index
    %c0_12 = arith.constant 0 : index
    %25 = vector.load %arg4[%c2, %c0_12] : memref<8x32xf32, #tpu.memory_space<vmem>>, vector<1x32xf32>
    %26 = arith.truncf %22 : vector<128x16xf32> to vector<128x16xbf16>
    %cst_13 = arith.constant dense<0.000000e+00> : vector<128x32xf32>
    %27 = tpu.matmul %26, %24, %cst_13 {dimension_numbers = #tpu.dot_dimension_numbers<[1], [0], [0], [1], [0, 0, 1, 1], [], []>} : vector<128x16xbf16>, vector<16x32xbf16>, vector<128x32xf32> -> vector<128x32xf32>
    %28 = vector.broadcast %25 : vector<1x32xf32> to vector<128x32xf32>
    %29 = arith.addf %27, %28 : vector<128x32xf32>
    %30 = math.tanh %29 : vector<128x32xf32>
    %c80 = arith.constant 80 : index
    %c0_14 = arith.constant 0 : index
    %31 = vector.load %arg3[%c80, %c0_14] : memref<112x32xbf16, #tpu.memory_space<vmem>>, vector<32x32xbf16>
    %c3 = arith.constant 3 : index
    %c0_15 = arith.constant 0 : index
    %32 = vector.load %arg4[%c3, %c0_15] : memref<8x32xf32, #tpu.memory_space<vmem>>, vector<1x32xf32>
    %33 = arith.truncf %30 : vector<128x32xf32> to vector<128x32xbf16>
    %cst_16 = arith.constant dense<0.000000e+00> : vector<128x32xf32>
    %34 = tpu.matmul %33, %31, %cst_16 {dimension_numbers = #tpu.dot_dimension_numbers<[1], [0], [0], [1], [0, 0, 1, 1], [], []>} : vector<128x32xbf16>, vector<32x32xbf16>, vector<128x32xf32> -> vector<128x32xf32>
    %35 = vector.broadcast %32 : vector<1x32xf32> to vector<128x32xf32>
    %36 = arith.addf %34, %35 : vector<128x32xf32>
    %37 = math.tanh %36 : vector<128x32xf32>
    %38 = arith.mulf %16, %16 : vector<128x16xf32>
    %39 = arith.addf %38, %23 : vector<128x16xf32>
    %40 = arith.subf %39, %17 : vector<128x16xf32>
    %cst_17 = arith.constant 1.000000e+00 : f32
    %41 = vector.broadcast %cst_17 : f32 to vector<128x16xf32>
    %42 = arith.subf %40, %41 : vector<128x16xf32>
    %cst_18 = arith.constant dense<0.000000e+00> : vector<128xf32>
    %43 = vector.multi_reduction <add>, %42, %cst_18 [1] : vector<128x16xf32> to vector<128xf32>
    %44 = vector.shape_cast %43 : vector<128xf32> to vector<128x1xf32>
    %cst_19 = arith.constant 0.000000e+00 : f32
    %45 = vector.broadcast %cst_19 : f32 to vector<128x79xf32>
    %46 = tpu.concatenate %37, %22, %44, %45 in 1 : vector<128x32xf32>, vector<128x16xf32>, vector<128x1xf32>, vector<128x79xf32> -> vector<128x128xf32>
    %c0_20 = arith.constant 0 : index
    %c0_21 = arith.constant 0 : index
    %47 = vector.load %arg5[%c0_20, %c0_21] : memref<128x128xf32, #tpu.memory_space<vmem>>, vector<128x128xf32>
    tpu.vector_store %arg5[%c0_20, %c0_21], %46 {strides = array<i32>} : memref<128x128xf32, #tpu.memory_space<vmem>>, vector<128x128xf32>,
    return
  }
  func.func @transform_0(%arg0: i32) -> (i32, i32) {
    %c0_i32 = arith.constant 0 : i32
    %c0_i32_0 = arith.constant 0 : i32
    return %arg0, %c0_i32 : i32, i32
  }
  func.func @transform_1(%arg0: i32) -> (i32, i32) {
    %c0_i32 = arith.constant 0 : i32
    %c0_i32_0 = arith.constant 0 : i32
    return %arg0, %c0_i32 : i32, i32
  }
  func.func @transform_2(%arg0: i32) -> (i32, i32) {
    %c0_i32 = arith.constant 0 : i32
    %c0_i32_0 = arith.constant 0 : i32
    %c0_i32_1 = arith.constant 0 : i32
    return %c0_i32, %c0_i32_0 : i32, i32
  }
  func.func @transform_3(%arg0: i32) -> (i32, i32) {
    %c0_i32 = arith.constant 0 : i32
    %c0_i32_0 = arith.constant 0 : i32
    %c0_i32_1 = arith.constant 0 : i32
    return %c0_i32, %c0_i32_0 : i32, i32
  }
  func.func @transform_4(%arg0: i32) -> (i32, i32) {
    %c0_i32 = arith.constant 0 : i32
    %c0_i32_0 = arith.constant 0 : i32
    return %arg0, %c0_i32 : i32, i32
  }
}

</mosaic_0001>

<llo_original>
// kernel: tpu_custom_call.1
$region0: #{tpu_custom_call.1}
  #allocation0 [shape = 'u32[]', space=smem, size = 0x4, offset = 0x4, fixed_abs, tag = 'smem constant byte address 0x4 - core index']
  #allocation1 [shape = 'u32[144,128]{1,0:T(1,128)}', space=vmem, size = 0x12000, scoped, tag = 'internal scratch']
  %s0 = inlined_call_operand.vmem [shape: f32[256,32], index: 0, kind: input, shape index: {}]
  %s1 = inlined_call_operand.vmem [shape: f32[256,16], index: 1, kind: input, shape index: {}]
  %s2 = inlined_call_operand.vmem [shape: bf16[112,32], index: 2, kind: input, shape index: {}]
  %s3 = inlined_call_operand.vmem [shape: f32[8,32], index: 3, kind: input, shape index: {}]
  %s4 = inlined_call_operand.hbm [shape: f32[256,128], index: 4, kind: output, shape index: {}]
  %s5 = sld [smem:[#allocation0]]
  $region49: #{tpu_custom_call.1} parent=0
    _
  %s7 = ssub.s32 1, %s5
  %s8 = scalar_select 0, %s7, %s5
  $region1: #{tpu_custom_call.1} parent=0
    #allocation2 [shape = 'u8[131072]{0}', space=vmem, size = 0x20000, scoped, tag = 'output window, operand 0']
    #allocation3 [shape = 's32[2]{0}', space=sflag, size = 0x8, scoped, tag = 'scoped memory for tpu_custom_call.1']
    %9 = vsyncpa [#allocation3], 0
    %s10 = scalar_lea.sflag [#allocation3], 1
    %11 = vsyncpa %s10, 0
    loop: start=0, step=1, limit=4
    $region2: #{tpu_custom_call.1} parent=1 // loop_pre_header
      _
    $region3: #{tpu_custom_call.1} parent=1 // loop_header
      %s13 = sphi 0, %s17
      %p14 = scmp.ge.s32.totalorder %s13, 4
      %s23 = sphi 0, %s25
      %s26 = sphi 0, %s23
      %s27 = sphi 0, %s26
      %s43 = sphi 0, %s27
      %s49 = sphi 0, %s51
      %s52 = sphi 0, %s49
      %s53 = sphi 0, %s52
      %s69 = sphi 0, %s53
      %s73 = sphi 0, %s73
      %s75 = sphi 0, %s73
      %s76 = sphi 0, %s75
      %s90 = sphi 0, %s76
      %s94 = sphi 0, %s94
      %s96 = sphi 0, %s94
      %s97 = sphi 0, %s96
      %s111 = sphi 0, %s97
      %s117 = sphi 0, %s119
      %s120 = sphi 0, %s117
      %s121 = sphi 0, %s120
      %s137 = sphi 0, %s121
    $region4: #{tpu_custom_call.1} parent=1 // loop_header_branch
      %16 = sbr.rel (%p14) target = $region8
    $region5: #{tpu_custom_call.1} parent=1 // loop_body
      %s18 = ssub.s32 %s13, 1
      %s19 = ssub.s32 %s13, 2
      %s20 = sadd.s32 %s13, 1
      %s21 = ssub.s32 %s13, %s20
      %p22 = scmp.eq.s32.totalorder %s21, 0
      %s24 = sadd.s32 %s23, 1
      %s25 = scalar_select %p22, %s23, %s24
      %p28 = pneg %p22
      %p29 = scmp.eq.s32.totalorder %s13, 1
      %p30 = por %p28, %p29
      %p31 = scmp.ne.s32.totalorder %s23, %s26
      %p32 = scmp.eq.s32.totalorder %s13, 0
      %p33 = por %p31, %p32
      %p34 = scmp.ne.s32.totalorder %s23, %s26
      %p35 = scmp.eq.s32.totalorder %s18, 1
      %p36 = por %p34, %p35
      %p37 = scmp.ne.s32.totalorder %s26, %s27
      %p38 = scmp.eq.s32.totalorder %s18, 0
      %p39 = por %p37, %p38
      %p40 = scmp.ne.s32.totalorder %s26, %s27
      %p41 = scmp.eq.s32.totalorder %s19, 1
      %p42 = por %p40, %p41
      %p44 = scmp.ne.s32.totalorder %s27, %s43
      %p45 = scmp.eq.s32.totalorder %s19, 0
      %p46 = por %p44, %p45
      %s47 = ssub.s32 %s13, %s20
      %p48 = scmp.eq.s32.totalorder %s47, 0
      %s50 = sadd.s32 %s49, 1
      %s51 = scalar_select %p48, %s49, %s50
      %p54 = pneg %p48
      %p55 = scmp.eq.s32.totalorder %s13, 1
      %p56 = por %p54, %p55
      %p57 = scmp.ne.s32.totalorder %s49, %s52
      %p58 = scmp.eq.s32.totalorder %s13, 0
      %p59 = por %p57, %p58
      %p60 = scmp.ne.s32.totalorder %s49, %s52
      %p61 = scmp.eq.s32.totalorder %s18, 1
      %p62 = por %p60, %p61
      %p63 = scmp.ne.s32.totalorder %s52, %s53
      %p64 = scmp.eq.s32.totalorder %s18, 0
      %p65 = por %p63, %p64
      %p66 = scmp.ne.s32.totalorder %s52, %s53
      %p67 = scmp.eq.s32.totalorder %s19, 1
      %p68 = por %p66, %p67
      %p70 = scmp.ne.s32.totalorder %s53, %s69
      %p71 = scmp.eq.s32.totalorder %s19, 0
      %p72 = por %p70, %p71
      %s74 = sadd.s32 %s73, 1
      %p77 = scmp.eq.s32.totalorder %s13, 1
      %p78 = scmp.ne.s32.totalorder %s73, %s75
      %p79 = scmp.eq.s32.totalorder %s13, 0
      %p80 = por %p78, %p79
      %p81 = scmp.ne.s32.totalorder %s73, %s75
      %p82 = scmp.eq.s32.totalorder %s18, 1
      %p83 = por %p81, %p82
      %p84 = scmp.ne.s32.totalorder %s75, %s76
      %p85 = scmp.eq.s32.totalorder %s18, 0
      %p86 = por %p84, %p85
      %p87 = scmp.ne.s32.totalorder %s75, %s76
      %p88 = scmp.eq.s32.totalorder %s19, 1
      %p89 = por %p87, %p88
      %p91 = scmp.ne.s32.totalorder %s76, %s90
      %p92 = scmp.eq.s32.totalorder %s19, 0
      %p93 = por %p91, %p92
      %s95 = sadd.s32 %s94, 1
      %p98 = scmp.eq.s32.totalorder %s13, 1
      %p99 = scmp.ne.s32.totalorder %s94, %s96
      %p100 = scmp.eq.s32.totalorder %s13, 0
      %p101 = por %p99, %p100
      %p102 = scmp.ne.s32.totalorder %s94, %s96
      %p103 = scmp.eq.s32.totalorder %s18, 1
      %p104 = por %p102, %p103
      %p105 = scmp.ne.s32.totalorder %s96, %s97
      %p106 = scmp.eq.s32.totalorder %s18, 0
      %p107 = por %p105, %p106
      %p108 = scmp.ne.s32.totalorder %s96, %s97
      %p109 = scmp.eq.s32.totalorder %s19, 1
      %p110 = por %p108, %p109
      %p112 = scmp.ne.s32.totalorder %s97, %s111
      %p113 = scmp.eq.s32.totalorder %s19, 0
      %p114 = por %p112, %p113
      %s115 = ssub.s32 %s13, %s20
      %p116 = scmp.eq.s32.totalorder %s115, 0
      %s118 = sadd.s32 %s117, 1
      %s119 = scalar_select %p116, %s117, %s118
      %p122 = pneg %p116
      %p123 = scmp.eq.s32.totalorder %s13, 1
      %p124 = por %p122, %p123
      %p125 = scmp.ne.s32.totalorder %s117, %s120
      %p126 = scmp.eq.s32.totalorder %s13, 0
      %p127 = por %p125, %p126
      %p128 = scmp.ne.s32.totalorder %s117, %s120
      %p129 = scmp.eq.s32.totalorder %s18, 1
      %p130 = por %p128, %p129
      %p131 = scmp.ne.s32.totalorder %s120, %s121
      %p132 = scmp.eq.s32.totalorder %s18, 0
      %p133 = por %p131, %p132
      %p134 = scmp.ne.s32.totalorder %s120, %s121
      %p135 = scmp.eq.s32.totalorder %s19, 1
      %p136 = por %p134, %p135
      %p138 = scmp.ne.s32.totalorder %s121, %s137
      %p139 = scmp.eq.s32.totalorder %s19, 0
      %p140 = por %p138, %p139
      %p141 = scmp.le.s32.totalorder 1, %s13
      %p142 = scmp.lt.s32.totalorder %s13, 3
      %p143 = pnand %p141, %p142
      %p144 = pneg %p143
      // Predicated region
      $region9: #{tpu_custom_call.1} parent=5 // pred_check
        _
      $region10: #{tpu_custom_call.1} parent=5 // pred_check_branch
        %146 = sbr.rel (%p143) target = $region12
      $region11: #{tpu_custom_call.1} parent=5 // pred_region
        %s147 = ssub.s32 %s13, 1
        // Predicated region
        $region13: #{tpu_custom_call.1} parent=11 // pred_check
          %p148 = pneg %p86
        $region14: #{tpu_custom_call.1} parent=11 // pred_check_branch
          %150 = sbr.rel (%p148) target = $region16
        $region15: #{tpu_custom_call.1} parent=11 // pred_region
          _
        $region16: #{tpu_custom_call.1} parent=11 // pred_fallthru
          _
        // Predicated region
        $region17: #{tpu_custom_call.1} parent=11 // pred_check
          %p151 = pneg %p107
        $region18: #{tpu_custom_call.1} parent=11 // pred_check_branch
          %153 = sbr.rel (%p151) target = $region20
        $region19: #{tpu_custom_call.1} parent=11 // pred_region
          _
        $region20: #{tpu_custom_call.1} parent=11 // pred_fallthru
          _
      $region12: #{tpu_custom_call.1} parent=5 // pred_fallthru
        _
      %p154 = scmp.lt.s32.totalorder %s13, 2
      // Predicated region
      $region21: #{tpu_custom_call.1} parent=5 // pred_check
        %p155 = pneg %p154
      $region22: #{tpu_custom_call.1} parent=5 // pred_check_branch
        %157 = sbr.rel (%p155) target = $region24
      $region23: #{tpu_custom_call.1} parent=5 // pred_region
        // Predicated region
        $region25: #{tpu_custom_call.1} parent=23 // pred_check
          %p158 = pneg %p33
        $region26: #{tpu_custom_call.1} parent=23 // pred_check_branch
          %160 = sbr.rel (%p158) target = $region28
        $region27: #{tpu_custom_call.1} parent=23 // pred_region
          %s161 = smul.u32 16, %s13
          %p162 = scmp.lt.s32.totalorder %s161, 31
          %s163 = scalar_select %p162, %s161, 31
          %s164 = smul.addr %s163, 8
          %s165 = scalar_lea.vmem %s0, %s164
          %s166 = smul.u32 16, %s13
        $region28: #{tpu_custom_call.1} parent=23 // pred_fallthru
          _
        // Predicated region
        $region29: #{tpu_custom_call.1} parent=23 // pred_check
          %p167 = pneg %p59
        $region30: #{tpu_custom_call.1} parent=23 // pred_check_branch
          %169 = sbr.rel (%p167) target = $region32
        $region31: #{tpu_custom_call.1} parent=23 // pred_region
          %s170 = smul.u32 16, %s13
          %p171 = scmp.lt.s32.totalorder %s170, 31
          %s172 = scalar_select %p171, %s170, 31
          %s173 = smul.addr %s172, 8
          %s174 = scalar_lea.vmem %s1, %s173
          %s175 = smul.u32 16, %s13
        $region32: #{tpu_custom_call.1} parent=23 // pred_fallthru
          _
      $region24: #{tpu_custom_call.1} parent=5 // pred_fallthru
        _
      %p176 = scmp.le.s32.totalorder 1, %s13
      %p177 = scmp.lt.s32.totalorder %s13, 3
      %p178 = pnand %p176, %p177
      %p179 = pneg %p178
      // Predicated region
      $region33: #{tpu_custom_call.1} parent=5 // pred_check
        _
      $region34: #{tpu_custom_call.1} parent=5 // pred_check_branch
        %181 = sbr.rel (%p178) target = $region36
      $region35: #{tpu_custom_call.1} parent=5 // pred_region
        %s182 = ssub.s32 %s13, 1
        %s183 = smul.u32 16, %s18
        %p184 = scmp.lt.s32.totalorder %s183, 31
        %s185 = scalar_select %p184, %s183, 31
        %s186 = smul.addr %s185, 8
        %s187 = scalar_lea.vmem %s0, %s186
        %p188 = pneg %p39
        %p189 = pneg %p36
        %s190 = smul.u32 16, %s18
        %p191 = scmp.lt.s32.totalorder %s190, 31
        %s192 = scalar_select %p191, %s190, 31
        %s193 = smul.addr %s192, 8
        %s194 = scalar_lea.vmem %s1, %s193
        %p195 = pneg %p65
        %p196 = pneg %p62
        %p197 = pneg %p86
        %p198 = pneg %p83
        %p199 = pneg %p107
        %p200 = pneg %p104
        %p201 = pneg %p133
        %p202 = pneg %p130
        %s203 = sand.u32 %s120, 1
        %s204 = scalar_lea.sflag [#allocation3], %s203
        %s205 = sand.u32 %s120, 1
        %s206 = smul.addr %s205, 128
        %s207 = scalar_lea.vmem [#allocation2], %s206
        %s208 = smul.u32 16, %s18
        %p209 = scmp.lt.s32.totalorder %s208, 31
        %s210 = scalar_select %p209, %s208, 31
        %s211 = smul.addr %s210, 8
        %s212 = scalar_lea.vmem %s0, %s211
        %s213 = smul.u32 16, %s18
        %s214 = smul.u32 16, %s18
        %p215 = scmp.lt.s32.totalorder %s214, 31
        %s216 = scalar_select %p215, %s214, 31
        %s217 = smul.addr %s216, 8
        %s218 = scalar_lea.vmem %s1, %s217
        %s219 = smul.u32 16, %s18
        %s220 = smul.u32 16, %s18
        %v222 = vld [vmem:[%s212] sm:$0xff]
        %v223 = vld [vmem:[%s212 + $0x8] sm:$0xff]
        %v224 = vld [vmem:[%s212 + $0x10] sm:$0xff]
        %v225 = vld [vmem:[%s212 + $0x18] sm:$0xff]
        %v226 = vld [vmem:[%s212 + $0x20] sm:$0xff]
        %v227 = vld [vmem:[%s212 + $0x28] sm:$0xff]
        %v228 = vld [vmem:[%s212 + $0x30] sm:$0xff]
        %v229 = vld [vmem:[%s212 + $0x38] sm:$0xff]
        %v230 = vld [vmem:[%s212 + $0x40] sm:$0xff]
        %v231 = vld [vmem:[%s212 + $0x48] sm:$0xff]
        %v232 = vld [vmem:[%s212 + $0x50] sm:$0xff]
        %v233 = vld [vmem:[%s212 + $0x58] sm:$0xff]
        %v234 = vld [vmem:[%s212 + $0x60] sm:$0xff]
        %v235 = vld [vmem:[%s212 + $0x68] sm:$0xff]
        %v236 = vld [vmem:[%s212 + $0x70] sm:$0xff]
        %v237 = vld [vmem:[%s212 + $0x78] sm:$0xff]
        %v238 = vld [vmem:[%s218] sm:$0xff]
        %v239 = vld [vmem:[%s218 + $0x8] sm:$0xff]
        %v240 = vld [vmem:[%s218 + $0x10] sm:$0xff]
        %v241 = vld [vmem:[%s218 + $0x18] sm:$0xff]
        %v242 = vld [vmem:[%s218 + $0x20] sm:$0xff]
        %v243 = vld [vmem:[%s218 + $0x28] sm:$0xff]
        %v244 = vld [vmem:[%s218 + $0x30] sm:$0xff]
        %v245 = vld [vmem:[%s218 + $0x38] sm:$0xff]
        %v246 = vld [vmem:[%s218 + $0x40] sm:$0xff]
        %v247 = vld [vmem:[%s218 + $0x48] sm:$0xff]
        %v248 = vld [vmem:[%s218 + $0x50] sm:$0xff]
        %v249 = vld [vmem:[%s218 + $0x58] sm:$0xff]
        %v250 = vld [vmem:[%s218 + $0x60] sm:$0xff]
        %v251 = vld [vmem:[%s218 + $0x68] sm:$0xff]
        %v252 = vld [vmem:[%s218 + $0x70] sm:$0xff]
        %v253 = vld [vmem:[%s218 + $0x78] sm:$0xff]
        %v254 = vld [vmem:[%s2] sm:$0xf]
        %v255 = vld [vmem:[%s2 + $0x4] sm:$0xf]
        %v256 = vld [vmem:[%s2 + $0x8] sm:$0xf]
        %v257 = vld [vmem:[%s2 + $0xc] sm:$0xf]
        %v258 = vld [vmem:[%s3] sm:$0x1]
        %v259 = vpack.c.bf16 %v223, %v222
        %v260 = vpack.c.bf16 %v225, %v224
        %v261 = vpack.c.bf16 %v227, %v226
        %v262 = vpack.c.bf16 %v229, %v228
        %v263 = vpack.c.bf16 %v231, %v230
        %v264 = vpack.c.bf16 %v233, %v232
        %v265 = vpack.c.bf16 %v235, %v234
        %v266 = vpack.c.bf16 %v237, %v236
        %v267 = vlaneseq
        %v268 = vshrl.u32 %v267, 7
        %v269 = vsub.s32 0, %v268
        %v270 = vrot.slane %v258, %v269
        %v275 = vunpack.c.l.b16 %v254
        %v276 = vunpack.c.l.b16 %v255
        %v277 = vunpack.c.l.b16 %v256
        %v278 = vunpack.c.l.b16 %v257
        %v279 = vpack.c.b16 %v276, %v275
        %v280 = vpack.c.b16 %v278, %v277
        %vm283 = vcmask 261120
        %v285 = vsel %vm283, %v259, 0
        %v288 = vsel %vm283, %v260, 0
        %v291 = vsel %vm283, %v261, 0
        %v294 = vsel %vm283, %v262, 0
        %v297 = vsel %vm283, %v263, 0
        %v300 = vsel %vm283, %v264, 0
        %v303 = vsel %vm283, %v265, 0
        %v306 = vsel %vm283, %v266, 0
        %308 = vmatprep.subr.bf16.mxu0 0
        %309 = vmatpush1.bf16.msra.mxu0 %v279
        %310 = vmatprep.subr.bf16.mxu0 0
        %311 = vmatpush1.bf16.msra.mxu0 %v280
        %312 = vmatprep.subr.bf16.mxu0 0
        %313 = vmatpush1.bf16.msra.mxu0 0
        %314 = vmatprep.subr.bf16.mxu0 0
        %315 = vmatpush1.bf16.msra.mxu0 0
        %316 = vmatprep.subr.bf16.mxu0 0
        %317 = vmatpush1.bf16.msra.mxu0 0
        %318 = vmatprep.subr.bf16.mxu0 0
        %319 = vmatpush1.bf16.msra.mxu0 0
        %320 = vmatprep.subr.bf16.mxu0 0
        %321 = vmatpush1.bf16.msra.mxu0 0
        %322 = vmatprep.subr.bf16.mxu0 0
        %323 = vmatpush1.bf16.msra.mxu0 0
        %324 = vmatprep.subr.bf16.mxu0 0
        %325 = vmatpush1.bf16.msra.mxu0 0
        %326 = vmatprep.subr.bf16.mxu0 0
        %327 = vmatpush1.bf16.msra.mxu0 0
        %328 = vmatprep.subr.bf16.mxu0 0
        %329 = vmatpush1.bf16.msra.mxu0 0
        %330 = vmatprep.subr.bf16.mxu0 0
        %331 = vmatpush1.bf16.msra.mxu0 0
        %332 = vmatprep.subr.bf16.mxu0 0
        %333 = vmatpush1.bf16.msra.mxu0 0
        %334 = vmatprep.subr.bf16.mxu0 0
        %335 = vmatpush1.bf16.msra.mxu0 0
        %336 = vmatprep.subr.bf16.mxu0 0
        %337 = vmatpush1.bf16.msra.mxu0 0
        %338 = vmatprep.subr.bf16.mxu0 0
        %339 = vmatpush1.bf16.msra.mxu0 0
        %340 = vmatprep.mubr.bf16.mxu0 0
        %341 = vmatmul.mubr.bf16.gmra.mrb[0].mxu0 %v285
        %v342 = vpop.f32.mrb[0].mxu0
        %v343 = vadd.f32 %v270, %v342
        %v344 = vpop.f32.mrb[0].mxu0
        %v345 = vpop.f32.mrb[0].mxu0
        %v346 = vadd.f32 %v270, %v345
        %v347 = vpop.f32.mrb[0].mxu0
        %348 = vmatprep.mubr.bf16.mxu0 0
        %349 = vmatmul.mubr.bf16.gmra.mrb[0].mxu0 %v288
        %v350 = vpop.f32.mrb[0].mxu0
        %v351 = vadd.f32 %v270, %v350
        %v352 = vpop.f32.mrb[0].mxu0
        %v353 = vpop.f32.mrb[0].mxu0
        %v354 = vadd.f32 %v270, %v353
        %v355 = vpop.f32.mrb[0].mxu0
        %356 = vmatprep.mubr.bf16.mxu0 0
        %357 = vmatmul.mubr.bf16.gmra.mrb[0].mxu0 %v291
        %v358 = vpop.f32.mrb[0].mxu0
        %v359 = vadd.f32 %v270, %v358
        %v360 = vpop.f32.mrb[0].mxu0
        %v361 = vpop.f32.mrb[0].mxu0
        %v362 = vadd.f32 %v270, %v361
        %v363 = vpop.f32.mrb[0].mxu0
        %364 = vmatprep.mubr.bf16.mxu0 0
        %365 = vmatmul.mubr.bf16.gmra.mrb[0].mxu0 %v294
        %v366 = vpop.f32.mrb[0].mxu0
        %v367 = vadd.f32 %v270, %v366
        %v368 = vpop.f32.mrb[0].mxu0
        %v369 = vpop.f32.mrb[0].mxu0
        %v370 = vadd.f32 %v270, %v369
        %v371 = vpop.f32.mrb[0].mxu0
        %372 = vmatprep.mubr.bf16.mxu0 0
        %373 = vmatmul.mubr.bf16.gmra.mrb[0].mxu0 %v297
        %v374 = vpop.f32.mrb[0].mxu0
        %v375 = vadd.f32 %v270, %v374
        %v376 = vpop.f32.mrb[0].mxu0
        %v377 = vpop.f32.mrb[0].mxu0
        %v378 = vadd.f32 %v270, %v377
        %v379 = vpop.f32.mrb[0].mxu0
        %380 = vmatprep.mubr.bf16.mxu0 0
        %381 = vmatmul.mubr.bf16.gmra.mrb[0].mxu0 %v300
        %v382 = vpop.f32.mrb[0].mxu0
        %v383 = vadd.f32 %v270, %v382
        %v384 = vpop.f32.mrb[0].mxu0
        %v385 = vpop.f32.mrb[0].mxu0
        %v386 = vadd.f32 %v270, %v385
        %v387 = vpop.f32.mrb[0].mxu0
        %388 = vmatprep.mubr.bf16.mxu0 0
        %389 = vmatmul.mubr.bf16.gmra.mrb[0].mxu0 %v303
        %v390 = vpop.f32.mrb[0].mxu0
        %v391 = vadd.f32 %v270, %v390
        %v392 = vpop.f32.mrb[0].mxu0
        %v393 = vpop.f32.mrb[0].mxu0
        %v394 = vadd.f32 %v270, %v393
        %v395 = vpop.f32.mrb[0].mxu0
        %396 = vmatprep.mubr.bf16.mxu0 0
        %397 = vmatmul.mubr.bf16.gmra.mrb[0].mxu0 %v306
        %v398 = vpop.f32.mrb[0].mxu0
        %v399 = vadd.f32 %v270, %v398
        %v400 = vpop.f32.mrb[0].mxu0
        %v401 = vpop.f32.mrb[0].mxu0
        %v402 = vadd.f32 %v270, %v401
        %v403 = vpop.f32.mrb[0].mxu0
        %404 = vdwg.mxu0
        %v405 = vtanh.pop %v343
        %v406 = vtanh.pop %v346
        %v407 = vtanh.pop %v351
        %v408 = vtanh.pop %v354
        %v409 = vtanh.pop %v359
        %v410 = vtanh.pop %v362
        %v411 = vtanh.pop %v367
        %v412 = vtanh.pop %v370
        %v413 = vtanh.pop %v375
        %v414 = vtanh.pop %v378
        %v415 = vtanh.pop %v383
        %v416 = vtanh.pop %v386
        %v417 = vtanh.pop %v391
        %v418 = vtanh.pop %v394
        %v419 = vtanh.pop %v399
        %v420 = vtanh.pop %v402
        %v421 = vld [vmem:[%s2 + $0x10] sm:$0xf]
        %v422 = vld [vmem:[%s2 + $0x14] sm:$0xf]
        %v423 = vld [vmem:[%s2 + $0x18] sm:$0xf]
        %v424 = vld [vmem:[%s2 + $0x1c] sm:$0xf]
        %v425 = vld [vmem:[%s3 + $0x1] sm:$0x1]
        %v426 = vpack.c.bf16 %v406, %v405
        %v427 = vpack.c.bf16 %v408, %v407
        %v428 = vpack.c.bf16 %v410, %v409
        %v429 = vpack.c.bf16 %v412, %v411
        %v430 = vpack.c.bf16 %v414, %v413
        %v431 = vpack.c.bf16 %v416, %v415
        %v432 = vpack.c.bf16 %v418, %v417
        %v433 = vpack.c.bf16 %v420, %v419
        %v434 = vlaneseq
        %v435 = vshrl.u32 %v434, 7
        %v436 = vsub.s32 0, %v435
        %v437 = vrot.slane %v425, %v436
        %v442 = vunpack.c.l.b16 %v421
        %v443 = vunpack.c.l.b16 %v422
        %v444 = vunpack.c.l.b16 %v423
        %v445 = vunpack.c.l.b16 %v424
        %v446 = vpack.c.b16 %v443, %v442
        %v447 = vpack.c.b16 %v445, %v444
        %v451 = vsel %vm283, %v426, 0
        %v454 = vsel %vm283, %v427, 0
        %v457 = vsel %vm283, %v428, 0
        %v460 = vsel %vm283, %v429, 0
        %v463 = vsel %vm283, %v430, 0
        %v466 = vsel %vm283, %v431, 0
        %v469 = vsel %vm283, %v432, 0
        %v472 = vsel %vm283, %v433, 0
        %474 = vmatprep.subr.bf16.mxu0 0
        %475 = vmatpush1.bf16.msra.mxu0 %v446
        %476 = vmatprep.subr.bf16.mxu0 0
        %477 = vmatpush1.bf16.msra.mxu0 %v447
        %478 = vmatprep.subr.bf16.mxu0 0
        %479 = vmatpush1.bf16.msra.mxu0 0
        %480 = vmatprep.subr.bf16.mxu0 0
        %481 = vmatpush1.bf16.msra.mxu0 0
        %482 = vmatprep.subr.bf16.mxu0 0
        %483 = vmatpush1.bf16.msra.mxu0 0
        %484 = vmatprep.subr.bf16.mxu0 0
        %485 = vmatpush1.bf16.msra.mxu0 0
        %486 = vmatprep.subr.bf16.mxu0 0
        %487 = vmatpush1.bf16.msra.mxu0 0
        %488 = vmatprep.subr.bf16.mxu0 0
        %489 = vmatpush1.bf16.msra.mxu0 0
        %490 = vmatprep.subr.bf16.mxu0 0
        %491 = vmatpush1.bf16.msra.mxu0 0
        %492 = vmatprep.subr.bf16.mxu0 0
        %493 = vmatpush1.bf16.msra.mxu0 0
        %494 = vmatprep.subr.bf16.mxu0 0
        %495 = vmatpush1.bf16.msra.mxu0 0
        %496 = vmatprep.subr.bf16.mxu0 0
        %497 = vmatpush1.bf16.msra.mxu0 0
        %498 = vmatprep.subr.bf16.mxu0 0
        %499 = vmatpush1.bf16.msra.mxu0 0
        %500 = vmatprep.subr.bf16.mxu0 0
        %501 = vmatpush1.bf16.msra.mxu0 0
        %502 = vmatprep.subr.bf16.mxu0 0
        %503 = vmatpush1.bf16.msra.mxu0 0
        %504 = vmatprep.subr.bf16.mxu0 0
        %505 = vmatpush1.bf16.msra.mxu0 0
        %506 = vmatprep.mubr.bf16.mxu0 0
        %507 = vmatmul.mubr.bf16.gmra.mrb[0].mxu0 %v451
        %v508 = vpop.f32.mrb[0].mxu0
        %v509 = vadd.f32 %v437, %v508
        %v510 = vpop.f32.mrb[0].mxu0
        %v511 = vpop.f32.mrb[0].mxu0
        %v512 = vadd.f32 %v437, %v511
        %v513 = vpop.f32.mrb[0].mxu0
        %514 = vmatprep.mubr.bf16.mxu0 0
        %515 = vmatmul.mubr.bf16.gmra.mrb[0].mxu0 %v454
        %v516 = vpop.f32.mrb[0].mxu0
        %v517 = vadd.f32 %v437, %v516
        %v518 = vpop.f32.mrb[0].mxu0
        %v519 = vpop.f32.mrb[0].mxu0
        %v520 = vadd.f32 %v437, %v519
        %v521 = vpop.f32.mrb[0].mxu0
        %522 = vmatprep.mubr.bf16.mxu0 0
        %523 = vmatmul.mubr.bf16.gmra.mrb[0].mxu0 %v457
        %v524 = vpop.f32.mrb[0].mxu0
        %v525 = vadd.f32 %v437, %v524
        %v526 = vpop.f32.mrb[0].mxu0
        %v527 = vpop.f32.mrb[0].mxu0
        %v528 = vadd.f32 %v437, %v527
        %v529 = vpop.f32.mrb[0].mxu0
        %530 = vmatprep.mubr.bf16.mxu0 0
        %531 = vmatmul.mubr.bf16.gmra.mrb[0].mxu0 %v460
        %v532 = vpop.f32.mrb[0].mxu0
        %v533 = vadd.f32 %v437, %v532
        %v534 = vpop.f32.mrb[0].mxu0
        %v535 = vpop.f32.mrb[0].mxu0
        %v536 = vadd.f32 %v437, %v535
        %v537 = vpop.f32.mrb[0].mxu0
        %538 = vmatprep.mubr.bf16.mxu0 0
        %539 = vmatmul.mubr.bf16.gmra.mrb[0].mxu0 %v463
        %v540 = vpop.f32.mrb[0].mxu0
        %v541 = vadd.f32 %v437, %v540
        %v542 = vpop.f32.mrb[0].mxu0
        %v543 = vpop.f32.mrb[0].mxu0
        %v544 = vadd.f32 %v437, %v543
        %v545 = vpop.f32.mrb[0].mxu0
        %546 = vmatprep.mubr.bf16.mxu0 0
        %547 = vmatmul.mubr.bf16.gmra.mrb[0].mxu0 %v466
        %v548 = vpop.f32.mrb[0].mxu0
        %v549 = vadd.f32 %v437, %v548
        %v550 = vpop.f32.mrb[0].mxu0
        %v551 = vpop.f32.mrb[0].mxu0
        %v552 = vadd.f32 %v437, %v551
        %v553 = vpop.f32.mrb[0].mxu0
        %554 = vmatprep.mubr.bf16.mxu0 0
        %555 = vmatmul.mubr.bf16.gmra.mrb[0].mxu0 %v469
        %v556 = vpop.f32.mrb[0].mxu0
        %v557 = vadd.f32 %v437, %v556
        %v558 = vpop.f32.mrb[0].mxu0
        %v559 = vpop.f32.mrb[0].mxu0
        %v560 = vadd.f32 %v437, %v559
        %v561 = vpop.f32.mrb[0].mxu0
        %562 = vmatprep.mubr.bf16.mxu0 0
        %563 = vmatmul.mubr.bf16.gmra.mrb[0].mxu0 %v472
        %v564 = vpop.f32.mrb[0].mxu0
        %v565 = vadd.f32 %v437, %v564
        %v566 = vpop.f32.mrb[0].mxu0
        %v567 = vpop.f32.mrb[0].mxu0
        %v568 = vadd.f32 %v437, %v567
        %v569 = vpop.f32.mrb[0].mxu0
        %570 = vdwg.mxu0
        %v571 = vtanh.pop %v509
        %v572 = vtanh.pop %v512
        %v573 = vtanh.pop %v517
        %v574 = vtanh.pop %v520
        %v575 = vtanh.pop %v525
        %v576 = vtanh.pop %v528
        %v577 = vtanh.pop %v533
        %v578 = vtanh.pop %v536
        %v579 = vtanh.pop %v541
        %v580 = vtanh.pop %v544
        %v581 = vtanh.pop %v549
        %v582 = vtanh.pop %v552
        %v583 = vtanh.pop %v557
        %v584 = vtanh.pop %v560
        %v585 = vtanh.pop %v565
        %v586 = vtanh.pop %v568
        %v587 = vmul.f32 %v571, 0.5
        %v588 = vmul.f32 %v572, 0.5
        %v589 = vmul.f32 %v573, 0.5
        %v590 = vmul.f32 %v574, 0.5
        %v591 = vmul.f32 %v575, 0.5
        %v592 = vmul.f32 %v576, 0.5
        %v593 = vmul.f32 %v577, 0.5
        %v594 = vmul.f32 %v578, 0.5
        %v595 = vmul.f32 %v579, 0.5
        %v596 = vmul.f32 %v580, 0.5
        %v597 = vmul.f32 %v581, 0.5
        %v598 = vmul.f32 %v582, 0.5
        %v599 = vmul.f32 %v583, 0.5
        %v600 = vmul.f32 %v584, 0.5
        %v601 = vmul.f32 %v585, 0.5
        %v602 = vmul.f32 %v586, 0.5
        %v603 = vmul.f32 %v587, 1.442695
        %v604 = vpow.pop %v603
        %v605 = vmul.f32 %v588, 1.442695
        %v606 = vpow.pop %v605
        %v607 = vmul.f32 %v589, 1.442695
        %v608 = vpow.pop %v607
        %v609 = vmul.f32 %v590, 1.442695
        %v610 = vpow.pop %v609
        %v611 = vmul.f32 %v591, 1.442695
        %v612 = vpow.pop %v611
        %v613 = vmul.f32 %v592, 1.442695
        %v614 = vpow.pop %v613
        %v615 = vmul.f32 %v593, 1.442695
        %v616 = vpow.pop %v615
        %v617 = vmul.f32 %v594, 1.442695
        %v618 = vpow.pop %v617
        %v619 = vmul.f32 %v595, 1.442695
        %v620 = vpow.pop %v619
        %v621 = vmul.f32 %v596, 1.442695
        %v622 = vpow.pop %v621
        %v623 = vmul.f32 %v597, 1.442695
        %v624 = vpow.pop %v623
        %v625 = vmul.f32 %v598, 1.442695
        %v626 = vpow.pop %v625
        %v627 = vmul.f32 %v599, 1.442695
        %v628 = vpow.pop %v627
        %v629 = vmul.f32 %v600, 1.442695
        %v630 = vpow.pop %v629
        %v631 = vmul.f32 %v601, 1.442695
        %v632 = vpow.pop %v631
        %v633 = vmul.f32 %v602, 1.442695
        %v634 = vpow.pop %v633
        %651 = vrot.lane.b32.xlu0 %v238, 16
        %v652 = vpop.permute.xlu0 %651
        %653 = vrot.lane.b32.xlu0 %v239, 16
        %v654 = vpop.permute.xlu0 %653
        %655 = vrot.lane.b32.xlu0 %v240, 16
        %v656 = vpop.permute.xlu0 %655
        %657 = vrot.lane.b32.xlu0 %v241, 16
        %v658 = vpop.permute.xlu0 %657
        %659 = vrot.lane.b32.xlu0 %v242, 16
        %v660 = vpop.permute.xlu0 %659
        %661 = vrot.lane.b32.xlu0 %v243, 16
        %v662 = vpop.permute.xlu0 %661
        %663 = vrot.lane.b32.xlu0 %v244, 16
        %v664 = vpop.permute.xlu0 %663
        %665 = vrot.lane.b32.xlu0 %v245, 16
        %v666 = vpop.permute.xlu0 %665
        %667 = vrot.lane.b32.xlu0 %v246, 16
        %v668 = vpop.permute.xlu0 %667
        %669 = vrot.lane.b32.xlu0 %v247, 16
        %v670 = vpop.permute.xlu0 %669
        %671 = vrot.lane.b32.xlu0 %v248, 16
        %v672 = vpop.permute.xlu0 %671
        %673 = vrot.lane.b32.xlu0 %v249, 16
        %v674 = vpop.permute.xlu0 %673
        %675 = vrot.lane.b32.xlu0 %v250, 16
        %v676 = vpop.permute.xlu0 %675
        %677 = vrot.lane.b32.xlu0 %v251, 16
        %v678 = vpop.permute.xlu0 %677
        %679 = vrot.lane.b32.xlu0 %v252, 16
        %v680 = vpop.permute.xlu0 %679
        %681 = vrot.lane.b32.xlu0 %v253, 16
        %v682 = vpop.permute.xlu0 %681
        %v699 = vmul.f32 %v604, %v652
        %v700 = vmul.f32 %v606, %v654
        %v701 = vmul.f32 %v608, %v656
        %v702 = vmul.f32 %v610, %v658
        %v703 = vmul.f32 %v612, %v660
        %v704 = vmul.f32 %v614, %v662
        %v705 = vmul.f32 %v616, %v664
        %v706 = vmul.f32 %v618, %v666
        %v707 = vmul.f32 %v620, %v668
        %v708 = vmul.f32 %v622, %v670
        %v709 = vmul.f32 %v624, %v672
        %v710 = vmul.f32 %v626, %v674
        %v711 = vmul.f32 %v628, %v676
        %v712 = vmul.f32 %v630, %v678
        %v713 = vmul.f32 %v632, %v680
        %v714 = vmul.f32 %v634, %v682
        %731 = vrot.lane.b32.xlu0 %v699, 112
        %v732 = vpop.permute.xlu0 %731
        %733 = vrot.lane.b32.xlu0 %v700, 112
        %v734 = vpop.permute.xlu0 %733
        %735 = vrot.lane.b32.xlu0 %v701, 112
        %v736 = vpop.permute.xlu0 %735
        %737 = vrot.lane.b32.xlu0 %v702, 112
        %v738 = vpop.permute.xlu0 %737
        %739 = vrot.lane.b32.xlu0 %v703, 112
        %v740 = vpop.permute.xlu0 %739
        %741 = vrot.lane.b32.xlu0 %v704, 112
        %v742 = vpop.permute.xlu0 %741
        %743 = vrot.lane.b32.xlu0 %v705, 112
        %v744 = vpop.permute.xlu0 %743
        %745 = vrot.lane.b32.xlu0 %v706, 112
        %v746 = vpop.permute.xlu0 %745
        %747 = vrot.lane.b32.xlu0 %v707, 112
        %v748 = vpop.permute.xlu0 %747
        %749 = vrot.lane.b32.xlu0 %v708, 112
        %v750 = vpop.permute.xlu0 %749
        %751 = vrot.lane.b32.xlu0 %v709, 112
        %v752 = vpop.permute.xlu0 %751
        %753 = vrot.lane.b32.xlu0 %v710, 112
        %v754 = vpop.permute.xlu0 %753
        %755 = vrot.lane.b32.xlu0 %v711, 112
        %v756 = vpop.permute.xlu0 %755
        %757 = vrot.lane.b32.xlu0 %v712, 112
        %v758 = vpop.permute.xlu0 %757
        %759 = vrot.lane.b32.xlu0 %v713, 112
        %v760 = vpop.permute.xlu0 %759
        %761 = vrot.lane.b32.xlu0 %v714, 112
        %v762 = vpop.permute.xlu0 %761
        %v779 = vadd.f32 %v571, %v732
        %v780 = vadd.f32 %v572, %v734
        %v781 = vadd.f32 %v573, %v736
        %v782 = vadd.f32 %v574, %v738
        %v783 = vadd.f32 %v575, %v740
        %v784 = vadd.f32 %v576, %v742
        %v785 = vadd.f32 %v577, %v744
        %v786 = vadd.f32 %v578, %v746
        %v787 = vadd.f32 %v579, %v748
        %v788 = vadd.f32 %v580, %v750
        %v789 = vadd.f32 %v581, %v752
        %v790 = vadd.f32 %v582, %v754
        %v791 = vadd.f32 %v583, %v756
        %v792 = vadd.f32 %v584, %v758
        %v793 = vadd.f32 %v585, %v760
        %v794 = vadd.f32 %v586, %v762
        %v795 = vmul.f32 %v604, %v604
        %v796 = vmul.f32 %v606, %v606
        %v797 = vmul.f32 %v608, %v608
        %v798 = vmul.f32 %v610, %v610
        %v799 = vmul.f32 %v612, %v612
        %v800 = vmul.f32 %v614, %v614
        %v801 = vmul.f32 %v616, %v616
        %v802 = vmul.f32 %v618, %v618
        %v803 = vmul.f32 %v620, %v620
        %v804 = vmul.f32 %v622, %v622
        %v805 = vmul.f32 %v624, %v624
        %v806 = vmul.f32 %v626, %v626
        %v807 = vmul.f32 %v628, %v628
        %v808 = vmul.f32 %v630, %v630
        %v809 = vmul.f32 %v632, %v632
        %v810 = vmul.f32 %v634, %v634
        %v811 = vld [vmem:[%s2 + $0x20] sm:$0xf]
        %v812 = vld [vmem:[%s2 + $0x24] sm:$0xf]
        %v813 = vld [vmem:[%s3 + $0x2] sm:$0x1]
        %v814 = vpack.c.bf16 %v780, %v779
        %v815 = vpack.c.bf16 %v782, %v781
        %v816 = vpack.c.bf16 %v784, %v783
        %v817 = vpack.c.bf16 %v786, %v785
        %v818 = vpack.c.bf16 %v788, %v787
        %v819 = vpack.c.bf16 %v790, %v789
        %v820 = vpack.c.bf16 %v792, %v791
        %v821 = vpack.c.bf16 %v794, %v793
        %v822 = vlaneseq
        %v823 = vshrl.u32 %v822, 7
        %v824 = vsub.s32 0, %v823
        %v825 = vrot.slane %v813, %v824
        %v828 = vunpack.c.l.b16 %v811
        %v829 = vunpack.c.l.b16 %v812
        %v830 = vpack.c.b16 %v829, %v828
        %vm832 = vcmask 130048
        %v834 = vsel %vm832, %v814, 0
        %v837 = vsel %vm832, %v815, 0
        %v840 = vsel %vm832, %v816, 0
        %v843 = vsel %vm832, %v817, 0
        %v846 = vsel %vm832, %v818, 0
        %v849 = vsel %vm832, %v819, 0
        %v852 = vsel %vm832, %v820, 0
        %v855 = vsel %vm832, %v821, 0
        %857 = vmatprep.subr.bf16.mxu0 0
        %858 = vmatpush1.bf16.msra.mxu0 %v830
        %859 = vmatprep.subr.bf16.mxu0 0
        %860 = vmatpush1.bf16.msra.mxu0 0
        %861 = vmatprep.subr.bf16.mxu0 0
        %862 = vmatpush1.bf16.msra.mxu0 0
        %863 = vmatprep.subr.bf16.mxu0 0
        %864 = vmatpush1.bf16.msra.mxu0 0
        %865 = vmatprep.subr.bf16.mxu0 0
        %866 = vmatpush1.bf16.msra.mxu0 0
        %867 = vmatprep.subr.bf16.mxu0 0
        %868 = vmatpush1.bf16.msra.mxu0 0
        %869 = vmatprep.subr.bf16.mxu0 0
        %870 = vmatpush1.bf16.msra.mxu0 0
        %871 = vmatprep.subr.bf16.mxu0 0
        %872 = vmatpush1.bf16.msra.mxu0 0
        %873 = vmatprep.subr.bf16.mxu0 0
        %874 = vmatpush1.bf16.msra.mxu0 0
        %875 = vmatprep.subr.bf16.mxu0 0
        %876 = vmatpush1.bf16.msra.mxu0 0
        %877 = vmatprep.subr.bf16.mxu0 0
        %878 = vmatpush1.bf16.msra.mxu0 0
        %879 = vmatprep.subr.bf16.mxu0 0
        %880 = vmatpush1.bf16.msra.mxu0 0
        %881 = vmatprep.subr.bf16.mxu0 0
        %882 = vmatpush1.bf16.msra.mxu0 0
        %883 = vmatprep.subr.bf16.mxu0 0
        %884 = vmatpush1.bf16.msra.mxu0 0
        %885 = vmatprep.subr.bf16.mxu0 0
        %886 = vmatpush1.bf16.msra.mxu0 0
        %887 = vmatprep.subr.bf16.mxu0 0
        %888 = vmatpush1.bf16.msra.mxu0 0
        %889 = vmatprep.mubr.bf16.mxu0 0
        %890 = vmatmul.mubr.bf16.gmra.mrb[0].mxu0 %v834
        %v891 = vpop.f32.mrb[0].mxu0
        %v892 = vadd.f32 %v825, %v891
        %v893 = vpop.f32.mrb[0].mxu0
        %v894 = vpop.f32.mrb[0].mxu0
        %v895 = vadd.f32 %v825, %v894
        %v896 = vpop.f32.mrb[0].mxu0
        %897 = vmatprep.mubr.bf16.mxu0 0
        %898 = vmatmul.mubr.bf16.gmra.mrb[0].mxu0 %v837
        %v899 = vpop.f32.mrb[0].mxu0
        %v900 = vadd.f32 %v825, %v899
        %v901 = vpop.f32.mrb[0].mxu0
        %v902 = vpop.f32.mrb[0].mxu0
        %v903 = vadd.f32 %v825, %v902
        %v904 = vpop.f32.mrb[0].mxu0
        %905 = vmatprep.mubr.bf16.mxu0 0
        %906 = vmatmul.mubr.bf16.gmra.mrb[0].mxu0 %v840
        %v907 = vpop.f32.mrb[0].mxu0
        %v908 = vadd.f32 %v825, %v907
        %v909 = vpop.f32.mrb[0].mxu0
        %v910 = vpop.f32.mrb[0].mxu0
        %v911 = vadd.f32 %v825, %v910
        %v912 = vpop.f32.mrb[0].mxu0
        %913 = vmatprep.mubr.bf16.mxu0 0
        %914 = vmatmul.mubr.bf16.gmra.mrb[0].mxu0 %v843
        %v915 = vpop.f32.mrb[0].mxu0
        %v916 = vadd.f32 %v825, %v915
        %v917 = vpop.f32.mrb[0].mxu0
        %v918 = vpop.f32.mrb[0].mxu0
        %v919 = vadd.f32 %v825, %v918
        %v920 = vpop.f32.mrb[0].mxu0
        %921 = vmatprep.mubr.bf16.mxu0 0
        %922 = vmatmul.mubr.bf16.gmra.mrb[0].mxu0 %v846
        %v923 = vpop.f32.mrb[0].mxu0
        %v924 = vadd.f32 %v825, %v923
        %v925 = vpop.f32.mrb[0].mxu0
        %v926 = vpop.f32.mrb[0].mxu0
        %v927 = vadd.f32 %v825, %v926
        %v928 = vpop.f32.mrb[0].mxu0
        %929 = vmatprep.mubr.bf16.mxu0 0
        %930 = vmatmul.mubr.bf16.gmra.mrb[0].mxu0 %v849
        %v931 = vpop.f32.mrb[0].mxu0
        %v932 = vadd.f32 %v825, %v931
        %v933 = vpop.f32.mrb[0].mxu0
        %v934 = vpop.f32.mrb[0].mxu0
        %v935 = vadd.f32 %v825, %v934
        %v936 = vpop.f32.mrb[0].mxu0
        %937 = vmatprep.mubr.bf16.mxu0 0
        %938 = vmatmul.mubr.bf16.gmra.mrb[0].mxu0 %v852
        %v939 = vpop.f32.mrb[0].mxu0
        %v940 = vadd.f32 %v825, %v939
        %v941 = vpop.f32.mrb[0].mxu0
        %v942 = vpop.f32.mrb[0].mxu0
        %v943 = vadd.f32 %v825, %v942
        %v944 = vpop.f32.mrb[0].mxu0
        %945 = vmatprep.mubr.bf16.mxu0 0
        %946 = vmatmul.mubr.bf16.gmra.mrb[0].mxu0 %v855
        %v947 = vpop.f32.mrb[0].mxu0
        %v948 = vadd.f32 %v825, %v947
        %v949 = vpop.f32.mrb[0].mxu0
        %v950 = vpop.f32.mrb[0].mxu0
        %v951 = vadd.f32 %v825, %v950
        %v952 = vpop.f32.mrb[0].mxu0
        %953 = vdwg.mxu0
        %v954 = vtanh.pop %v892
        %v955 = vtanh.pop %v895
        %v956 = vtanh.pop %v900
        %v957 = vtanh.pop %v903
        %v958 = vtanh.pop %v908
        %v959 = vtanh.pop %v911
        %v960 = vtanh.pop %v916
        %v961 = vtanh.pop %v919
        %v962 = vtanh.pop %v924
        %v963 = vtanh.pop %v927
        %v964 = vtanh.pop %v932
        %v965 = vtanh.pop %v935
        %v966 = vtanh.pop %v940
        %v967 = vtanh.pop %v943
        %v968 = vtanh.pop %v948
        %v969 = vtanh.pop %v951
        %v970 = vld [vmem:[%s2 + $0x28] sm:$0xf]
        %v971 = vld [vmem:[%s2 + $0x2c] sm:$0xf]
        %v972 = vld [vmem:[%s2 + $0x30] sm:$0xf]
        %v973 = vld [vmem:[%s2 + $0x34] sm:$0xf]
        %v974 = vld [vmem:[%s3 + $0x3] sm:$0x1]
        %v975 = vpack.c.bf16 %v955, %v954
        %v976 = vpack.c.bf16 %v957, %v956
        %v977 = vpack.c.bf16 %v959, %v958
        %v978 = vpack.c.bf16 %v961, %v960
        %v979 = vpack.c.bf16 %v963, %v962
        %v980 = vpack.c.bf16 %v965, %v964
        %v981 = vpack.c.bf16 %v967, %v966
        %v982 = vpack.c.bf16 %v969, %v968
        %v983 = vlaneseq
        %v984 = vshrl.u32 %v983, 7
        %v985 = vsub.s32 0, %v984
        %v986 = vrot.slane %v974, %v985
        %v991 = vunpack.c.l.b16 %v970
        %v992 = vunpack.c.l.b16 %v971
        %v993 = vunpack.c.l.b16 %v972
        %v994 = vunpack.c.l.b16 %v973
        %v995 = vpack.c.b16 %v992, %v991
        %v996 = vpack.c.b16 %v994, %v993
        %v1000 = vsel %vm283, %v975, 0
        %v1003 = vsel %vm283, %v976, 0
        %v1006 = vsel %vm283, %v977, 0
        %v1009 = vsel %vm283, %v978, 0
        %v1012 = vsel %vm283, %v979, 0
        %v1015 = vsel %vm283, %v980, 0
        %v1018 = vsel %vm283, %v981, 0
        %v1021 = vsel %vm283, %v982, 0
        %1023 = vmatprep.subr.bf16.mxu0 0
        %1024 = vmatpush1.bf16.msra.mxu0 %v995
        %1025 = vmatprep.subr.bf16.mxu0 0
        %1026 = vmatpush1.bf16.msra.mxu0 %v996
        %1027 = vmatprep.subr.bf16.mxu0 0
        %1028 = vmatpush1.bf16.msra.mxu0 0
        %1029 = vmatprep.subr.bf16.mxu0 0
        %1030 = vmatpush1.bf16.msra.mxu0 0
        %1031 = vmatprep.subr.bf16.mxu0 0
        %1032 = vmatpush1.bf16.msra.mxu0 0
        %1033 = vmatprep.subr.bf16.mxu0 0
        %1034 = vmatpush1.bf16.msra.mxu0 0
        %1035 = vmatprep.subr.bf16.mxu0 0
        %1036 = vmatpush1.bf16.msra.mxu0 0
        %1037 = vmatprep.subr.bf16.mxu0 0
        %1038 = vmatpush1.bf16.msra.mxu0 0
        %1039 = vmatprep.subr.bf16.mxu0 0
        %1040 = vmatpush1.bf16.msra.mxu0 0
        %1041 = vmatprep.subr.bf16.mxu0 0
        %1042 = vmatpush1.bf16.msra.mxu0 0
        %1043 = vmatprep.subr.bf16.mxu0 0
        %1044 = vmatpush1.bf16.msra.mxu0 0
        %1045 = vmatprep.subr.bf16.mxu0 0
        %1046 = vmatpush1.bf16.msra.mxu0 0
        %1047 = vmatprep.subr.bf16.mxu0 0
        %1048 = vmatpush1.bf16.msra.mxu0 0
        %1049 = vmatprep.subr.bf16.mxu0 0
        %1050 = vmatpush1.bf16.msra.mxu0 0
        %1051 = vmatprep.subr.bf16.mxu0 0
        %1052 = vmatpush1.bf16.msra.mxu0 0
        %1053 = vmatprep.subr.bf16.mxu0 0
        %1054 = vmatpush1.bf16.msra.mxu0 0
        %1055 = vmatprep.mubr.bf16.mxu0 0
        %1056 = vmatmul.mubr.bf16.gmra.mrb[0].mxu0 %v1000
        %v1057 = vpop.f32.mrb[0].mxu0
        %v1058 = vadd.f32 %v986, %v1057
        %v1059 = vpop.f32.mrb[0].mxu0
        %v1060 = vpop.f32.mrb[0].mxu0
        %v1061 = vadd.f32 %v986, %v1060
        %v1062 = vpop.f32.mrb[0].mxu0
        %1063 = vmatprep.mubr.bf16.mxu0 0
        %1064 = vmatmul.mubr.bf16.gmra.mrb[0].mxu0 %v1003
        %v1065 = vpop.f32.mrb[0].mxu0
        %v1066 = vadd.f32 %v986, %v1065
        %v1067 = vpop.f32.mrb[0].mxu0
        %v1068 = vpop.f32.mrb[0].mxu0
        %v1069 = vadd.f32 %v986, %v1068
        %v1070 = vpop.f32.mrb[0].mxu0
        %1071 = vmatprep.mubr.bf16.mxu0 0
        %1072 = vmatmul.mubr.bf16.gmra.mrb[0].mxu0 %v1006
        %v1073 = vpop.f32.mrb[0].mxu0
        %v1074 = vadd.f32 %v986, %v1073
        %v1075 = vpop.f32.mrb[0].mxu0
        %v1076 = vpop.f32.mrb[0].mxu0
        %v1077 = vadd.f32 %v986, %v1076
        %v1078 = vpop.f32.mrb[0].mxu0
        %1079 = vmatprep.mubr.bf16.mxu0 0
        %1080 = vmatmul.mubr.bf16.gmra.mrb[0].mxu0 %v1009
        %v1081 = vpop.f32.mrb[0].mxu0
        %v1082 = vadd.f32 %v986, %v1081
        %v1083 = vpop.f32.mrb[0].mxu0
        %v1084 = vpop.f32.mrb[0].mxu0
        %v1085 = vadd.f32 %v986, %v1084
        %v1086 = vpop.f32.mrb[0].mxu0
        %1087 = vmatprep.mubr.bf16.mxu0 0
        %1088 = vmatmul.mubr.bf16.gmra.mrb[0].mxu0 %v1012
        %v1089 = vpop.f32.mrb[0].mxu0
        %v1090 = vadd.f32 %v986, %v1089
        %v1091 = vpop.f32.mrb[0].mxu0
        %v1092 = vpop.f32.mrb[0].mxu0
        %v1093 = vadd.f32 %v986, %v1092
        %v1094 = vpop.f32.mrb[0].mxu0
        %1095 = vmatprep.mubr.bf16.mxu0 0
        %1096 = vmatmul.mubr.bf16.gmra.mrb[0].mxu0 %v1015
        %v1097 = vpop.f32.mrb[0].mxu0
        %v1098 = vadd.f32 %v986, %v1097
        %v1099 = vpop.f32.mrb[0].mxu0
        %v1100 = vpop.f32.mrb[0].mxu0
        %v1101 = vadd.f32 %v986, %v1100
        %v1102 = vpop.f32.mrb[0].mxu0
        %1103 = vmatprep.mubr.bf16.mxu0 0
        %1104 = vmatmul.mubr.bf16.gmra.mrb[0].mxu0 %v1018
        %v1105 = vpop.f32.mrb[0].mxu0
        %v1106 = vadd.f32 %v986, %v1105
        %v1107 = vpop.f32.mrb[0].mxu0
        %v1108 = vpop.f32.mrb[0].mxu0
        %v1109 = vadd.f32 %v986, %v1108
        %v1110 = vpop.f32.mrb[0].mxu0
        %1111 = vmatprep.mubr.bf16.mxu0 0
        %1112 = vmatmul.mubr.bf16.gmra.mrb[0].mxu0 %v1021
        %v1113 = vpop.f32.mrb[0].mxu0
        %v1114 = vadd.f32 %v986, %v1113
        %v1115 = vpop.f32.mrb[0].mxu0
        %v1116 = vpop.f32.mrb[0].mxu0
        %v1117 = vadd.f32 %v986, %v1116
        %v1118 = vpop.f32.mrb[0].mxu0
        %1119 = vdwg.mxu0
        %v1120 = vtanh.pop %v1058
        %v1121 = vtanh.pop %v1061
        %v1122 = vtanh.pop %v1066
        %v1123 = vtanh.pop %v1069
        %v1124 = vtanh.pop %v1074
        %v1125 = vtanh.pop %v1077
        %v1126 = vtanh.pop %v1082
        %v1127 = vtanh.pop %v1085
        %v1128 = vtanh.pop %v1090
        %v1129 = vtanh.pop %v1093
        %v1130 = vtanh.pop %v1098
        %v1131 = vtanh.pop %v1101
        %v1132 = vtanh.pop %v1106
        %v1133 = vtanh.pop %v1109
        %v1134 = vtanh.pop %v1114
        %v1135 = vtanh.pop %v1117
        %v1136 = vmul.f32 %v571, %v571
        %v1137 = vmul.f32 %v572, %v572
        %v1138 = vmul.f32 %v573, %v573
        %v1139 = vmul.f32 %v574, %v574
        %v1140 = vmul.f32 %v575, %v575
        %v1141 = vmul.f32 %v576, %v576
        %v1142 = vmul.f32 %v577, %v577
        %v1143 = vmul.f32 %v578, %v578
        %v1144 = vmul.f32 %v579, %v579
        %v1145 = vmul.f32 %v580, %v580
        %v1146 = vmul.f32 %v581, %v581
        %v1147 = vmul.f32 %v582, %v582
        %v1148 = vmul.f32 %v583, %v583
        %v1149 = vmul.f32 %v584, %v584
        %v1150 = vmul.f32 %v585, %v585
        %v1151 = vmul.f32 %v586, %v586
        %1168 = vrot.lane.b32.xlu0 %v795, 112
        %v1169 = vpop.permute.xlu0 %1168
        %1170 = vrot.lane.b32.xlu0 %v796, 112
        %v1171 = vpop.permute.xlu0 %1170
        %1172 = vrot.lane.b32.xlu0 %v797, 112
        %v1173 = vpop.permute.xlu0 %1172
        %1174 = vrot.lane.b32.xlu0 %v798, 112
        %v1175 = vpop.permute.xlu0 %1174
        %1176 = vrot.lane.b32.xlu0 %v799, 112
        %v1177 = vpop.permute.xlu0 %1176
        %1178 = vrot.lane.b32.xlu0 %v800, 112
        %v1179 = vpop.permute.xlu0 %1178
        %1180 = vrot.lane.b32.xlu0 %v801, 112
        %v1181 = vpop.permute.xlu0 %1180
        %1182 = vrot.lane.b32.xlu0 %v802, 112
        %v1183 = vpop.permute.xlu0 %1182
        %1184 = vrot.lane.b32.xlu0 %v803, 112
        %v1185 = vpop.permute.xlu0 %1184
        %1186 = vrot.lane.b32.xlu0 %v804, 112
        %v1187 = vpop.permute.xlu0 %1186
        %1188 = vrot.lane.b32.xlu0 %v805, 112
        %v1189 = vpop.permute.xlu0 %1188
        %1190 = vrot.lane.b32.xlu0 %v806, 112
        %v1191 = vpop.permute.xlu0 %1190
        %1192 = vrot.lane.b32.xlu0 %v807, 112
        %v1193 = vpop.permute.xlu0 %1192
        %1194 = vrot.lane.b32.xlu0 %v808, 112
        %v1195 = vpop.permute.xlu0 %1194
        %1196 = vrot.lane.b32.xlu0 %v809, 112
        %v1197 = vpop.permute.xlu0 %1196
        %1198 = vrot.lane.b32.xlu0 %v810, 112
        %v1199 = vpop.permute.xlu0 %1198
        %v1216 = vadd.f32 %v1136, %v1169
        %v1217 = vadd.f32 %v1137, %v1171
        %v1218 = vadd.f32 %v1138, %v1173
        %v1219 = vadd.f32 %v1139, %v1175
        %v1220 = vadd.f32 %v1140, %v1177
        %v1221 = vadd.f32 %v1141, %v1179
        %v1222 = vadd.f32 %v1142, %v1181
        %v1223 = vadd.f32 %v1143, %v1183
        %v1224 = vadd.f32 %v1144, %v1185
        %v1225 = vadd.f32 %v1145, %v1187
        %v1226 = vadd.f32 %v1146, %v1189
        %v1227 = vadd.f32 %v1147, %v1191
        %v1228 = vadd.f32 %v1148, %v1193
        %v1229 = vadd.f32 %v1149, %v1195
        %v1230 = vadd.f32 %v1150, %v1197
        %v1231 = vadd.f32 %v1151, %v1199
        %1248 = vrot.lane.b32.xlu0 %v571, 112
        %v1249 = vpop.permute.xlu0 %1248
        %1250 = vrot.lane.b32.xlu0 %v572, 112
        %v1251 = vpop.permute.xlu0 %1250
        %1252 = vrot.lane.b32.xlu0 %v573, 112
        %v1253 = vpop.permute.xlu0 %1252
        %1254 = vrot.lane.b32.xlu0 %v574, 112
        %v1255 = vpop.permute.xlu0 %1254
        %1256 = vrot.lane.b32.xlu0 %v575, 112
        %v1257 = vpop.permute.xlu0 %1256
        %1258 = vrot.lane.b32.xlu0 %v576, 112
        %v1259 = vpop.permute.xlu0 %1258
        %1260 = vrot.lane.b32.xlu0 %v577, 112
        %v1261 = vpop.permute.xlu0 %1260
        %1262 = vrot.lane.b32.xlu0 %v578, 112
        %v1263 = vpop.permute.xlu0 %1262
        %1264 = vrot.lane.b32.xlu0 %v579, 112
        %v1265 = vpop.permute.xlu0 %1264
        %1266 = vrot.lane.b32.xlu0 %v580, 112
        %v1267 = vpop.permute.xlu0 %1266
        %1268 = vrot.lane.b32.xlu0 %v581, 112
        %v1269 = vpop.permute.xlu0 %1268
        %1270 = vrot.lane.b32.xlu0 %v582, 112
        %v1271 = vpop.permute.xlu0 %1270
        %1272 = vrot.lane.b32.xlu0 %v583, 112
        %v1273 = vpop.permute.xlu0 %1272
        %1274 = vrot.lane.b32.xlu0 %v584, 112
        %v1275 = vpop.permute.xlu0 %1274
        %1276 = vrot.lane.b32.xlu0 %v585, 112
        %v1277 = vpop.permute.xlu0 %1276
        %1278 = vrot.lane.b32.xlu0 %v586, 112
        %v1279 = vpop.permute.xlu0 %1278
        %v1296 = vsub.f32 %v1216, %v1249
        %v1297 = vsub.f32 %v1217, %v1251
        %v1298 = vsub.f32 %v1218, %v1253
        %v1299 = vsub.f32 %v1219, %v1255
        %v1300 = vsub.f32 %v1220, %v1257
        %v1301 = vsub.f32 %v1221, %v1259
        %v1302 = vsub.f32 %v1222, %v1261
        %v1303 = vsub.f32 %v1223, %v1263
        %v1304 = vsub.f32 %v1224, %v1265
        %v1305 = vsub.f32 %v1225, %v1267
        %v1306 = vsub.f32 %v1226, %v1269
        %v1307 = vsub.f32 %v1227, %v1271
        %v1308 = vsub.f32 %v1228, %v1273
        %v1309 = vsub.f32 %v1229, %v1275
        %v1310 = vsub.f32 %v1230, %v1277
        %v1311 = vsub.f32 %v1231, %v1279
        %v1312 = vsub.f32 %v1296, 1.0
        %v1313 = vsub.f32 %v1297, 1.0
        %v1314 = vsub.f32 %v1298, 1.0
        %v1315 = vsub.f32 %v1299, 1.0
        %v1316 = vsub.f32 %v1300, 1.0
        %v1317 = vsub.f32 %v1301, 1.0
        %v1318 = vsub.f32 %v1302, 1.0
        %v1319 = vsub.f32 %v1303, 1.0
        %v1320 = vsub.f32 %v1304, 1.0
        %v1321 = vsub.f32 %v1305, 1.0
        %v1322 = vsub.f32 %v1306, 1.0
        %v1323 = vsub.f32 %v1307, 1.0
        %v1324 = vsub.f32 %v1308, 1.0
        %v1325 = vsub.f32 %v1309, 1.0
        %v1326 = vsub.f32 %v1310, 1.0
        %v1327 = vsub.f32 %v1311, 1.0
        %v1328 = vsel %vm832, %v1312, 0.0
        %1329 = vadd.xlane.f32.xlu0 %v1328
        %v1330 = vpop.xlane.xlu0 %1329
        %v1331 = vsel %vm832, %v1313, 0.0
        %1332 = vadd.xlane.f32.xlu0 %v1331
        %v1333 = vpop.xlane.xlu0 %1332
        %v1334 = vsel %vm832, %v1314, 0.0
        %1335 = vadd.xlane.f32.xlu0 %v1334
        %v1336 = vpop.xlane.xlu0 %1335
        %v1337 = vsel %vm832, %v1315, 0.0
        %1338 = vadd.xlane.f32.xlu0 %v1337
        %v1339 = vpop.xlane.xlu0 %1338
        %v1340 = vsel %vm832, %v1316, 0.0
        %1341 = vadd.xlane.f32.xlu0 %v1340
        %v1342 = vpop.xlane.xlu0 %1341
        %v1343 = vsel %vm832, %v1317, 0.0
        %1344 = vadd.xlane.f32.xlu0 %v1343
        %v1345 = vpop.xlane.xlu0 %1344
        %v1346 = vsel %vm832, %v1318, 0.0
        %1347 = vadd.xlane.f32.xlu0 %v1346
        %v1348 = vpop.xlane.xlu0 %1347
        %v1349 = vsel %vm832, %v1319, 0.0
        %1350 = vadd.xlane.f32.xlu0 %v1349
        %v1351 = vpop.xlane.xlu0 %1350
        %v1352 = vsel %vm832, %v1320, 0.0
        %1353 = vadd.xlane.f32.xlu0 %v1352
        %v1354 = vpop.xlane.xlu0 %1353
        %v1355 = vsel %vm832, %v1321, 0.0
        %1356 = vadd.xlane.f32.xlu0 %v1355
        %v1357 = vpop.xlane.xlu0 %1356
        %v1358 = vsel %vm832, %v1322, 0.0
        %1359 = vadd.xlane.f32.xlu0 %v1358
        %v1360 = vpop.xlane.xlu0 %1359
        %v1361 = vsel %vm832, %v1323, 0.0
        %1362 = vadd.xlane.f32.xlu0 %v1361
        %v1363 = vpop.xlane.xlu0 %1362
        %v1364 = vsel %vm832, %v1324, 0.0
        %1365 = vadd.xlane.f32.xlu0 %v1364
        %v1366 = vpop.xlane.xlu0 %1365
        %v1367 = vsel %vm832, %v1325, 0.0
        %1368 = vadd.xlane.f32.xlu0 %v1367
        %v1369 = vpop.xlane.xlu0 %1368
        %v1370 = vsel %vm832, %v1326, 0.0
        %1371 = vadd.xlane.f32.xlu0 %v1370
        %v1372 = vpop.xlane.xlu0 %1371
        %v1373 = vsel %vm832, %v1327, 0.0
        %1374 = vadd.xlane.f32.xlu0 %v1373
        %v1375 = vpop.xlane.xlu0 %1374
        %1392 = vrot.lane.b32.xlu0 %v779, 32
        %v1393 = vpop.permute.xlu0 %1392
        %1394 = vrot.lane.b32.xlu0 %v780, 32
        %v1395 = vpop.permute.xlu0 %1394
        %1396 = vrot.lane.b32.xlu0 %v781, 32
        %v1397 = vpop.permute.xlu0 %1396
        %1398 = vrot.lane.b32.xlu0 %v782, 32
        %v1399 = vpop.permute.xlu0 %1398
        %1400 = vrot.lane.b32.xlu0 %v783, 32
        %v1401 = vpop.permute.xlu0 %1400
        %1402 = vrot.lane.b32.xlu0 %v784, 32
        %v1403 = vpop.permute.xlu0 %1402
        %1404 = vrot.lane.b32.xlu0 %v785, 32
        %v1405 = vpop.permute.xlu0 %1404
        %1406 = vrot.lane.b32.xlu0 %v786, 32
        %v1407 = vpop.permute.xlu0 %1406
        %1408 = vrot.lane.b32.xlu0 %v787, 32
        %v1409 = vpop.permute.xlu0 %1408
        %1410 = vrot.lane.b32.xlu0 %v788, 32
        %v1411 = vpop.permute.xlu0 %1410
        %1412 = vrot.lane.b32.xlu0 %v789, 32
        %v1413 = vpop.permute.xlu0 %1412
        %1414 = vrot.lane.b32.xlu0 %v790, 32
        %v1415 = vpop.permute.xlu0 %1414
        %1416 = vrot.lane.b32.xlu0 %v791, 32
        %v1417 = vpop.permute.xlu0 %1416
        %1418 = vrot.lane.b32.xlu0 %v792, 32
        %v1419 = vpop.permute.xlu0 %1418
        %1420 = vrot.lane.b32.xlu0 %v793, 32
        %v1421 = vpop.permute.xlu0 %1420
        %1422 = vrot.lane.b32.xlu0 %v794, 32
        %v1423 = vpop.permute.xlu0 %1422
        %v1440 = vsel %vm283, %v1120, %v1393
        %v1441 = vsel %vm283, %v1121, %v1395
        %v1442 = vsel %vm283, %v1122, %v1397
        %v1443 = vsel %vm283, %v1123, %v1399
        %v1444 = vsel %vm283, %v1124, %v1401
        %v1445 = vsel %vm283, %v1125, %v1403
        %v1446 = vsel %vm283, %v1126, %v1405
        %v1447 = vsel %vm283, %v1127, %v1407
        %v1448 = vsel %vm283, %v1128, %v1409
        %v1449 = vsel %vm283, %v1129, %v1411
        %v1450 = vsel %vm283, %v1130, %v1413
        %v1451 = vsel %vm283, %v1131, %v1415
        %v1452 = vsel %vm283, %v1132, %v1417
        %v1453 = vsel %vm283, %v1133, %v1419
        %v1454 = vsel %vm283, %v1134, %v1421
        %v1455 = vsel %vm283, %v1135, %v1423
        %vm1456 = vcmask 392192
        %v1457 = vsel %vm1456, %v1440, %v1330
        %v1458 = vsel %vm1456, %v1441, %v1333
        %v1459 = vsel %vm1456, %v1442, %v1336
        %v1460 = vsel %vm1456, %v1443, %v1339
        %v1461 = vsel %vm1456, %v1444, %v1342
        %v1462 = vsel %vm1456, %v1445, %v1345
        %v1463 = vsel %vm1456, %v1446, %v1348
        %v1464 = vsel %vm1456, %v1447, %v1351
        %v1465 = vsel %vm1456, %v1448, %v1354
        %v1466 = vsel %vm1456, %v1449, %v1357
        %v1467 = vsel %vm1456, %v1450, %v1360
        %v1468 = vsel %vm1456, %v1451, %v1363
        %v1469 = vsel %vm1456, %v1452, %v1366
        %v1470 = vsel %vm1456, %v1453, %v1369
        %v1471 = vsel %vm1456, %v1454, %v1372
        %v1472 = vsel %vm1456, %v1455, %v1375
        %vm1473 = vcmask 400384
        %v1474 = vsel %vm1473, %v1457, 0.0
        %v1475 = vsel %vm1473, %v1458, 0.0
        %v1476 = vsel %vm1473, %v1459, 0.0
        %v1477 = vsel %vm1473, %v1460, 0.0
        %v1478 = vsel %vm1473, %v1461, 0.0
        %v1479 = vsel %vm1473, %v1462, 0.0
        %v1480 = vsel %vm1473, %v1463, 0.0
        %v1481 = vsel %vm1473, %v1464, 0.0
        %v1482 = vsel %vm1473, %v1465, 0.0
        %v1483 = vsel %vm1473, %v1466, 0.0
        %v1484 = vsel %vm1473, %v1467, 0.0
        %v1485 = vsel %vm1473, %v1468, 0.0
        %v1486 = vsel %vm1473, %v1469, 0.0
        %v1487 = vsel %vm1473, %v1470, 0.0
        %v1488 = vsel %vm1473, %v1471, 0.0
        %v1489 = vsel %vm1473, %v1472, 0.0
        %1490 = vst [vmem:[%s207] sm:$0xff] %v1474
        %1491 = vst [vmem:[%s207 + $0x8] sm:$0xff] %v1475
        %1492 = vst [vmem:[%s207 + $0x10] sm:$0xff] %v1476
        %1493 = vst [vmem:[%s207 + $0x18] sm:$0xff] %v1477
        %1494 = vst [vmem:[%s207 + $0x20] sm:$0xff] %v1478
        %1495 = vst [vmem:[%s207 + $0x28] sm:$0xff] %v1479
        %1496 = vst [vmem:[%s207 + $0x30] sm:$0xff] %v1480
        %1497 = vst [vmem:[%s207 + $0x38] sm:$0xff] %v1481
        %1498 = vst [vmem:[%s207 + $0x40] sm:$0xff] %v1482
        %1499 = vst [vmem:[%s207 + $0x48] sm:$0xff] %v1483
        %1500 = vst [vmem:[%s207 + $0x50] sm:$0xff] %v1484
        %1501 = vst [vmem:[%s207 + $0x58] sm:$0xff] %v1485
        %1502 = vst [vmem:[%s207 + $0x60] sm:$0xff] %v1486
        %1503 = vst [vmem:[%s207 + $0x68] sm:$0xff] %v1487
        %1504 = vst [vmem:[%s207 + $0x70] sm:$0xff] %v1488
        %1505 = vst [vmem:[%s207 + $0x78] sm:$0xff] %v1489
        %s1506 = sand.u32 %s120, 1
        %s1507 = scalar_lea.sflag [#allocation3], %s1506
        %s1508 = sand.u32 %s120, 1
        %s1509 = smul.addr %s1508, 128
        %s1510 = scalar_lea.vmem [#allocation2], %s1509
        // Predicated region
        $region37: #{tpu_custom_call.1} parent=35 // pred_check
          %p1511 = pneg %p130
        $region38: #{tpu_custom_call.1} parent=35 // pred_check_branch
          %1513 = sbr.rel (%p1511) target = $region40
        $region39: #{tpu_custom_call.1} parent=35 // pred_region
          %s1514 = smul.u32 16, %s18
          %s1516 = ssub.s32 2048, 2048
          %1517 = vsyncadd %s1507, %s1516
          %s1518 = smul.addr %s1514, 128
          %s1519 = scalar_lea.hbm %s4, %s1518
          %s1520 = sshll.u32 %s1510, 4
          %s1521 = int_to_ptr.vmem [resolvable:$true] %s1520
          %1526 = dma.vmem_to_hbm [thread:$0]  %s1521, 2048, %s1519, %s1507, 128, 128, 8
        $region40: #{tpu_custom_call.1} parent=35 // pred_fallthru
          _
      $region36: #{tpu_custom_call.1} parent=5 // pred_fallthru
        _
      %p1527 = scmp.le.s32.totalorder 2, %s13
      // Predicated region
      $region41: #{tpu_custom_call.1} parent=5 // pred_check
        %p1528 = pneg %p1527
      $region42: #{tpu_custom_call.1} parent=5 // pred_check_branch
        %1530 = sbr.rel (%p1528) target = $region44
      $region43: #{tpu_custom_call.1} parent=5 // pred_region
        %s1531 = ssub.s32 %s13, 2
        // Predicated region
        $region45: #{tpu_custom_call.1} parent=43 // pred_check
          %p1532 = pneg %p136
        $region46: #{tpu_custom_call.1} parent=43 // pred_check_branch
          %1534 = sbr.rel (%p1532) target = $region48
        $region47: #{tpu_custom_call.1} parent=43 // pred_region
          %s1535 = sand.u32 %s121, 1
          %s1536 = scalar_lea.sflag [#allocation3], %s1535
          %s1537 = sand.u32 %s121, 1
          %s1538 = smul.addr %s1537, 128
          %s1539 = scalar_lea.vmem [#allocation2], %s1538
          %1540 = dma.done %s1536, 2048
        $region48: #{tpu_custom_call.1} parent=43 // pred_fallthru
          _
      $region44: #{tpu_custom_call.1} parent=5 // pred_fallthru
        _
    $region6: #{tpu_custom_call.1} parent=1 // loop_footer
      %s17 = sadd.s32 1, %s13
    $region7: #{tpu_custom_call.1} parent=1 // loop_footer_branch
      %12 = sbr.rel target = $region3
    $region8: #{tpu_custom_call.1} parent=1 // loop_exit
      _
    %1541 = vsyncpa [#allocation3], 1
    %s1542 = scalar_lea.sflag [#allocation3], 1
    %1543 = vsyncpa %s1542, 1

</llo_original>
